<compile_context>
chip_gen: v5e
topology: v5e:2x2
jax: 0.10.0
libtpu: 0.0.40
codegen_flags: <defaults>
</compile_context>

<pallas_src>
import functools

import jax
import jax.numpy as jnp
from jax import lax
from jax.experimental import pallas as pl
from jax.experimental.pallas import tpu as pltpu


# --------------------------- fused (primary) kernel -------------------------

def _cam2_fused_kernel(w_ref, x_ref, o_ref, mbuf_ref, *, k_size, off, inv_count):
    """Per-sample fused: mean -> conv1d(k)+sigmoid over channels -> scale.

    w_ref:    (k,)  f32 conv weights in SMEM.
    x_ref:    (C, H*W) one sample's stripe (batch dim squeezed away).
    o_ref:    (C, H*W) output stripe.
    mbuf_ref: (off + C + off, 1) f32 scratch, zero-padded channel buffer.
    """
    pad = (k_size - 1) // 2
    C = x_ref.shape[0]

    # (1) per-(n, c) mean over the spatial/lane axis, f32 accumulation.
    m = jnp.sum(x_ref[...].astype(jnp.float32), axis=1, keepdims=True) * inv_count

    # (2) Conv1d(1, 1, k, zero-pad, no bias) over the channel (sublane) axis +
    #     sigmoid, done on the resident means.  Writing the means at a
    #     sublane-aligned offset into a zeroed scratch turns the k taps into
    #     static shifted reads -- no HBM round trip, no extra pallas_call.
    mbuf_ref[...] = jnp.zeros_like(mbuf_ref)
    mbuf_ref[pl.ds(off, C), :] = m
    y = w_ref[0] * mbuf_ref[pl.ds(off - pad, C), :]
    for j in range(1, k_size):
        y = y + w_ref[j] * mbuf_ref[pl.ds(off - pad + j, C), :]
    scale = 1.0 / (1.0 + jnp.exp(-y))                       # (C, 1) f32

    # (3) broadcast multiply in x's dtype (bf16-native VALUs on v6e/v7x).
    o_ref[...] = x_ref[...] * scale.astype(o_ref.dtype)


# --------------------------- streaming fallback kernels ----------------------

def _row_mean_kernel(x_ref, o_ref, *, cols, tcol, inv_count, mask_cols):
    """Per-row (= per (n, c)) mean; accumulates directly into the output block."""
    k = pl.program_id(1)

    @pl.when(k == 0)
    def _():
        o_ref[...] = jnp.zeros_like(o_ref)

    xb = x_ref[...].astype(jnp.float32)
    if mask_cols:  # ragged tail along the spatial axis (cdiv grid)
        cidx = k * tcol + lax.broadcasted_iota(jnp.int32, xb.shape, 1)
        xb = jnp.where(cidx < cols, xb, 0.0)
    o_ref[...] += jnp.sum(xb, axis=1, keepdims=True)

    @pl.when(k == pl.num_programs(1) - 1)
    def _():
        o_ref[...] = o_ref[...] * inv_count


def _row_scale_kernel(x_ref, s_ref, o_ref):
    """out[r, :] = x[r, :] * scale[r, 0]  (scale already in x's dtype)."""
    o_ref[...] = x_ref[...] * s_ref[...]


# --------------------------- tiling / budgets --------------------------------

# Fused path: ~2x double-buffered input stripe + ~2x output stripe must fit
# the scoped VMEM limit we request (32 MiB works on v5e/v6e/v7x; v7x physical
# per-TC VMEM is 64 MiB).
_FUSED_VMEM_BUDGET = 28 * 1024 * 1024
_FUSED_VMEM_LIMIT = 32 * 1024 * 1024

# Streaming fallback block size: ~2 MiB is near the HBM-roofline knee on v6e
# and keeps the double-buffered working set well inside v5e's 16 MiB scoped
# default (could be raised to ~4 MiB on v6e/v7x with vmem_limit_bytes).
_STREAM_BLOCK_BYTES = 2 * 1024 * 1024


def _round_down(v: int, m: int) -> int:
    return max(m, (v // m) * m)


# --------------------------- wrapper -----------------------------------------

def cam2_forward(x: jax.Array, conv_w: jax.Array, *,
                 fused_vmem_budget: int = _FUSED_VMEM_BUDGET) -> jax.Array:
    """CAM2 forward: x * sigmoid(conv1d(global_avg_pool(x))), x is NCHW."""
    N, C, H, W = x.shape
    HW = H * W
    ebytes = x.dtype.itemsize
    sub = {4: 8, 2: 16, 1: 32}.get(ebytes, 8)   # dtype-aware sublane granularity

    k_size = int(conv_w.size)
    pad = (k_size - 1) // 2
    w = conv_w.reshape(k_size).astype(jnp.float32)

    stripe_bytes = C * HW * ebytes
    fused_vmem = 4 * stripe_bytes + 64 * 1024   # 2x in + 2x out (double-buffered)

    if fused_vmem <= fused_vmem_budget:
        # -------- single fused kernel: read x once, write out once ----------
        off = max(8, ((pad + 7) // 8) * 8)      # sublane-aligned scratch offset
        x3 = x.reshape(N, C, HW)                # free view of contiguous NCHW
        out3 = pl.pallas_call(
            functools.partial(_cam2_fused_kernel, k_size=k_size, off=off,
                              inv_count=1.0 / float(HW)),
            out_shape=jax.ShapeDtypeStruct((N, C, HW), x.dtype),
            grid=(N,),
            in_specs=[
                pl.BlockSpec(memory_space=pltpu.MemorySpace.SMEM),   # conv weights
                pl.BlockSpec((None, C, HW), lambda n: (n, 0, 0)),    # sample stripe
            ],
            out_specs=pl.BlockSpec((None, C, HW), lambda n: (n, 0, 0)),
            scratch_shapes=[pltpu.VMEM((off + C + off, 1), jnp.float32)],
            compiler_params=pltpu.CompilerParams(
                dimension_semantics=("parallel",),
                vmem_limit_bytes=_FUSED_VMEM_LIMIT),
            cost_estimate=pl.CostEstimate(
                flops=2 * N * C * HW + 2 * N * C * k_size,
                transcendentals=N * C,
                bytes_accessed=2 * N * C * HW * ebytes + k_size * 4),
        )(w, x3)
        return out3.reshape(N, C, H, W)

    # -------- fallback: two streaming passes + tiny jnp conv in the wrapper --
    rows, cols = N * C, HW
    x2 = x.reshape(rows, cols)                  # lane-dense view, no copy

    # Capped, (sub,128)-aligned tiles; cdiv grids handle ragged shapes, so no
    # full-extent block can blow past the scoped VMEM limit.
    max_lane = max(128, _round_down(_STREAM_BLOCK_BYTES // (sub * ebytes), 128))
    tcol = cols if cols <= max_lane else max_lane
    max_row = max(sub, _round_down(_STREAM_BLOCK_BYTES // (tcol * ebytes), sub))
    trow = rows if rows <= max_row else max_row
    grid_rows = pl.cdiv(rows, trow)
    grid_cols = pl.cdiv(cols, tcol)
    mask_cols = (cols % tcol) != 0

    means = pl.pallas_call(
        functools.partial(_row_mean_kernel, cols=cols, tcol=tcol,
                          inv_count=1.0 / float(cols), mask_cols=mask_cols),
        out_shape=jax.ShapeDtypeStruct((rows, 1), jnp.float32),
        grid=(grid_rows, grid_cols),
        in_specs=[pl.BlockSpec((trow, tcol), lambda i, k: (i, k))],
        out_specs=pl.BlockSpec((trow, 1), lambda i, k: (i, 0)),
        compiler_params=pltpu.CompilerParams(
            dimension_semantics=("parallel", "arbitrary")),
        cost_estimate=pl.CostEstimate(
            flops=rows * cols, transcendentals=0,
            bytes_accessed=rows * cols * ebytes + rows * 4),
    )(x2)

    # conv1d(k) + sigmoid on N*C means: negligible work, plain jnp (a separate
    # pallas_call here would be pure launch + HBM round-trip overhead).
    m = means.reshape(N, C)
    mpad = jnp.pad(m, ((0, 0), (pad, pad)))
    y = sum(w[j] * mpad[:, j:j + C] for j in range(k_size))
    scale2 = jax.nn.sigmoid(y).astype(x.dtype).reshape(rows, 1)

    out2 = pl.pallas_call(
        _row_scale_kernel,
        out_shape=jax.ShapeDtypeStruct((rows, cols), x.dtype),
        grid=(grid_rows, grid_cols),
        in_specs=[pl.BlockSpec((trow, tcol), lambda i, j: (i, j)),
                  pl.BlockSpec((trow, 1), lambda i, j: (i, 0))],
        out_specs=pl.BlockSpec((trow, tcol), lambda i, j: (i, j)),
        compiler_params=pltpu.CompilerParams(
            dimension_semantics=("parallel", "parallel")),
        cost_estimate=pl.CostEstimate(
            flops=rows * cols, transcendentals=0,
            bytes_accessed=2 * rows * cols * ebytes + rows * ebytes),
    )(x2, scale2)
    return out2.reshape(N, C, H, W)


# --------------------------- reference ---------------------------------------

def cam2_ref(x: jax.Array, conv_w: jax.Array) -> jax.Array:
    N, C, H, W = x.shape
    k_size = int(conv_w.size)
    pad = (k_size - 1) // 2
    w = conv_w.reshape(k_size).astype(jnp.float32)
    m = jnp.mean(x.astype(jnp.float32), axis=(2, 3))        # (N, C)
    mpad = jnp.pad(m, ((0, 0), (pad, pad)))
    y = sum(w[j] * mpad[:, j:j + C] for j in range(k_size))
    s = jax.nn.sigmoid(y)
    return (x * s[:, :, None, None].astype(x.dtype)).astype(x.dtype)


if __name__ == "__main__":
    key = jax.random.PRNGKey(0)
    k_x, k_w = jax.random.split(key)

    # NCHW, matching the PyTorch module: batch=2, channels=4, spatial=16x16
    N, C, H, W = 2, 4, 16, 16
    x = jax.random.normal(k_x, (N, C, H, W), dtype=jnp.float32)

    # Conv1d(1, 1, kernel_size=3, padding=1, bias=False) weight, flattened.
    k_size = 3
    bound = 1.0 / float(k_size) ** 0.5
    conv_w = jax.random.uniform(
        k_w, (k_size,), dtype=jnp.float32, minval=-bound, maxval=bound)

    ref = cam2_ref(x, conv_w)

    # Primary fused path (one HBM read + one HBM write of x).
    out = jax.block_until_ready(jax.jit(cam2_forward)(x, conv_w))
    assert out.shape == x.shape and out.dtype == x.dtype
    assert jnp.allclose(out, ref, atol=1e-5, rtol=1e-5), float(
        jnp.max(jnp.abs(out - ref)))

    # Streaming fallback path (forced) — covers stripes too big for VMEM.
    out_fb = jax.block_until_ready(
        jax.jit(functools.partial(cam2_forward, fused_vmem_budget=0))(x, conv_w))
    assert jnp.allclose(out_fb, ref, atol=1e-5, rtol=1e-5), float(
        jnp.max(jnp.abs(out_fb - ref)))

    print("KERNEL_OK")
</pallas_src>

<mosaic_0001>
module attributes {stable_mosaic.version = 11 : i64} {
  func.func @_cam2_fused_kernel(%arg0: i32, %arg1: memref<3xf32, #tpu.memory_space<smem>>, %arg2: memref<1x4x256xf32, #tpu.memory_space<vmem>>, %arg3: memref<1x4x256xf32, #tpu.memory_space<vmem>>, %arg4: memref<20x1xf32, #tpu.memory_space<vmem>>) attributes {dimension_semantics = [#tpu.dimension_semantics<parallel>], iteration_bounds = array<i64: 2>, scalar_prefetch = 0 : i64, scratch_operands = 1 : i64, tpu.core_type = #tpu.core_type<tc>, window_params = [{transform_indices = @transform_0, window_bounds = array<i64: 3>}, {transform_indices = @transform_1, window_bounds = array<i64: 1, 4, 256>}, {transform_indices = @transform_2, window_bounds = array<i64: 1, 4, 256>}]} {
    %c0 = arith.constant 0 : index
    %c0_0 = arith.constant 0 : index
    %c0_1 = arith.constant 0 : index
    %0 = vector.load %arg2[%c0, %c0_0, %c0_1] : memref<1x4x256xf32, #tpu.memory_space<vmem>>, vector<1x4x256xf32>
    %1 = vector.shape_cast %0 : vector<1x4x256xf32> to vector<4x256xf32>
    %cst = arith.constant dense<0.000000e+00> : vector<4xf32>
    %2 = vector.multi_reduction <add>, %1, %cst [1] : vector<4x256xf32> to vector<4xf32>
    %3 = vector.shape_cast %2 : vector<4xf32> to vector<4x1xf32>
    %cst_2 = arith.constant 3.906250e-03 : f32
    %4 = vector.broadcast %cst_2 : f32 to vector<4x1xf32>
    %5 = arith.mulf %3, %4 : vector<4x1xf32>
    %cst_3 = arith.constant 0.000000e+00 : f32
    %6 = vector.broadcast %cst_3 : f32 to vector<20x1xf32>
    %c0_4 = arith.constant 0 : index
    %c0_5 = arith.constant 0 : index
    %7 = vector.load %arg4[%c0_4, %c0_5] : memref<20x1xf32, #tpu.memory_space<vmem>>, vector<20x1xf32>
    tpu.vector_store %arg4[%c0_4, %c0_5], %6 {strides = array<i32>} : memref<20x1xf32, #tpu.memory_space<vmem>>, vector<20x1xf32>,
    %c8 = arith.constant 8 : index
    %c0_6 = arith.constant 0 : index
    %8 = vector.load %arg4[%c8, %c0_6] : memref<20x1xf32, #tpu.memory_space<vmem>>, vector<4x1xf32>
    tpu.vector_store %arg4[%c8, %c0_6], %5 {strides = array<i32>} : memref<20x1xf32, #tpu.memory_space<vmem>>, vector<4x1xf32>,
    %c0_7 = arith.constant 0 : index
    %9 = memref.load %arg1[%c0_7] : memref<3xf32, #tpu.memory_space<smem>>
    %c7 = arith.constant 7 : index
    %c0_8 = arith.constant 0 : index
    %10 = vector.load %arg4[%c7, %c0_8] : memref<20x1xf32, #tpu.memory_space<vmem>>, vector<4x1xf32>
    %11 = vector.broadcast %9 : f32 to vector<4x1xf32>
    %12 = arith.mulf %11, %10 : vector<4x1xf32>
    %c1 = arith.constant 1 : index
    %13 = memref.load %arg1[%c1] : memref<3xf32, #tpu.memory_space<smem>>
    %c8_9 = arith.constant 8 : index
    %c0_10 = arith.constant 0 : index
    %14 = vector.load %arg4[%c8_9, %c0_10] : memref<20x1xf32, #tpu.memory_space<vmem>>, vector<4x1xf32>
    %15 = vector.broadcast %13 : f32 to vector<4x1xf32>
    %16 = arith.mulf %15, %14 : vector<4x1xf32>
    %17 = arith.addf %12, %16 : vector<4x1xf32>
    %c2 = arith.constant 2 : index
    %18 = memref.load %arg1[%c2] : memref<3xf32, #tpu.memory_space<smem>>
    %c9 = arith.constant 9 : index
    %c0_11 = arith.constant 0 : index
    %19 = vector.load %arg4[%c9, %c0_11] : memref<20x1xf32, #tpu.memory_space<vmem>>, vector<4x1xf32>
    %20 = vector.broadcast %18 : f32 to vector<4x1xf32>
    %21 = arith.mulf %20, %19 : vector<4x1xf32>
    %22 = arith.addf %17, %21 : vector<4x1xf32>
    %cst_12 = arith.constant 0.000000e+00 : f32
    %23 = vector.broadcast %cst_12 : f32 to vector<4x1xf32>
    %24 = arith.subf %23, %22 : vector<4x1xf32>
    %25 = math.exp %24 : vector<4x1xf32>
    %cst_13 = arith.constant 1.000000e+00 : f32
    %26 = vector.broadcast %cst_13 : f32 to vector<4x1xf32>
    %27 = arith.addf %26, %25 : vector<4x1xf32>
    %cst_14 = arith.constant 1.000000e+00 : f32
    %28 = vector.broadcast %cst_14 : f32 to vector<4x1xf32>
    %29 = arith.divf %28, %27 : vector<4x1xf32>
    %c0_15 = arith.constant 0 : index
    %c0_16 = arith.constant 0 : index
    %c0_17 = arith.constant 0 : index
    %30 = vector.load %arg2[%c0_15, %c0_16, %c0_17] : memref<1x4x256xf32, #tpu.memory_space<vmem>>, vector<1x4x256xf32>
    %31 = vector.shape_cast %30 : vector<1x4x256xf32> to vector<4x256xf32>
    %32 = vector.broadcast %29 : vector<4x1xf32> to vector<4x256xf32>
    %33 = arith.mulf %31, %32 : vector<4x256xf32>
    %c0_18 = arith.constant 0 : index
    %c0_19 = arith.constant 0 : index
    %c0_20 = arith.constant 0 : index
    %34 = vector.load %arg3[%c0_18, %c0_19, %c0_20] : memref<1x4x256xf32, #tpu.memory_space<vmem>>, vector<1x4x256xf32>
    %35 = vector.shape_cast %34 : vector<1x4x256xf32> to vector<4x256xf32>
    %36 = vector.shape_cast %33 : vector<4x256xf32> to vector<1x4x256xf32>
    tpu.vector_store %arg3[%c0_18, %c0_19, %c0_20], %36 {strides = array<i32>} : memref<1x4x256xf32, #tpu.memory_space<vmem>>, vector<1x4x256xf32>,
    return
  }
  func.func @transform_0(%arg0: i32) -> i32 {
    %c0_i32 = arith.constant 0 : i32
    %c0_i32_0 = arith.constant 0 : i32
    return %c0_i32 : i32
  }
  func.func @transform_1(%arg0: i32) -> (i32, i32, i32) {
    %c0_i32 = arith.constant 0 : i32
    %c0_i32_0 = arith.constant 0 : i32
    %c0_i32_1 = arith.constant 0 : i32
    return %arg0, %c0_i32, %c0_i32_0 : i32, i32, i32
  }
  func.func @transform_2(%arg0: i32) -> (i32, i32, i32) {
    %c0_i32 = arith.constant 0 : i32
    %c0_i32_0 = arith.constant 0 : i32
    %c0_i32_1 = arith.constant 0 : i32
    return %arg0, %c0_i32, %c0_i32_0 : i32, i32, i32
  }
}

</mosaic_0001>

<llo_original>
// kernel: cam2_forward.1
$region0: #{cam2_forward.1}
  #allocation0 [shape = 'u32[]', space=smem, size = 0x4, offset = 0x4, fixed_abs, tag = 'smem constant byte address 0x4 - core index']
  #allocation1 [shape = 'u32[72,128]{1,0:T(1,128)}', space=vmem, size = 0x9000, scoped, tag = 'internal scratch']
  #allocation2 [shape = 'f32[20,1]{1,0:T(8,128)}', space=vmem, size = 0x3000, scoped, tag = 'scratch operand']
  %s0 = inlined_call_operand.vmem [shape: f32[3], index: 0, kind: input, shape index: {}]
  %s1 = inlined_call_operand.vmem [shape: f32[2,4,256], index: 1, kind: input, shape index: {}]
  %s2 = inlined_call_operand.vmem [shape: f32[2,4,256], index: 2, kind: output, shape index: {}]
  %s3 = sld [smem:[#allocation0]]
  $region45: #{cam2_forward.1} parent=0
    _
  %s5 = ssub.s32 1, %s3
  %s6 = scalar_select 0, %s5, %s3
  $region1: #{cam2_forward.1} parent=0
    #allocation3 [shape = 'u8[512]{0}', space=smem, size = 0x200, scoped, tag = 'input window, operand 0, single buffered']
    #allocation4 [shape = 's32[2]{0}', space=sflag, size = 0x8, scoped, tag = 'scoped memory for cam2_forward.1']
    %7 = vsyncpa [#allocation4], 0
    loop: start=0, step=1, limit=4
    $region2: #{cam2_forward.1} parent=1 // loop_pre_header
      _
    $region3: #{cam2_forward.1} parent=1 // loop_header
      %s9 = sphi 0, %s13
      %p10 = scmp.ge.s32.totalorder %s9, 4
      %s17 = sphi 0, %s17
      %s19 = sphi 0, %s17
      %s20 = sphi 0, %s19
      %s34 = sphi 0, %s20
      %s40 = sphi 0, %s42
      %s43 = sphi 0, %s40
      %s44 = sphi 0, %s43
      %s60 = sphi 0, %s44
      %s66 = sphi 0, %s68
      %s69 = sphi 0, %s66
      %s70 = sphi 0, %s69
      %s86 = sphi 0, %s70
    $region4: #{cam2_forward.1} parent=1 // loop_header_branch
      %12 = sbr.rel (%p10) target = $region8
    $region5: #{cam2_forward.1} parent=1 // loop_body
      %s14 = ssub.s32 %s9, 1
      %s15 = ssub.s32 %s9, 2
      %s16 = sadd.s32 %s9, 1
      %s18 = sadd.s32 %s17, 1
      %p21 = scmp.eq.s32.totalorder %s9, 1
      %p22 = scmp.ne.s32.totalorder %s17, %s19
      %p23 = scmp.eq.s32.totalorder %s9, 0
      %p24 = por %p22, %p23
      %p25 = scmp.ne.s32.totalorder %s17, %s19
      %p26 = scmp.eq.s32.totalorder %s14, 1
      %p27 = por %p25, %p26
      %p28 = scmp.ne.s32.totalorder %s19, %s20
      %p29 = scmp.eq.s32.totalorder %s14, 0
      %p30 = por %p28, %p29
      %p31 = scmp.ne.s32.totalorder %s19, %s20
      %p32 = scmp.eq.s32.totalorder %s15, 1
      %p33 = por %p31, %p32
      %p35 = scmp.ne.s32.totalorder %s20, %s34
      %p36 = scmp.eq.s32.totalorder %s15, 0
      %p37 = por %p35, %p36
      %s38 = ssub.s32 %s9, %s16
      %p39 = scmp.eq.s32.totalorder %s38, 0
      %s41 = sadd.s32 %s40, 1
      %s42 = scalar_select %p39, %s40, %s41
      %p45 = pneg %p39
      %p46 = scmp.eq.s32.totalorder %s9, 1
      %p47 = por %p45, %p46
      %p48 = scmp.ne.s32.totalorder %s40, %s43
      %p49 = scmp.eq.s32.totalorder %s9, 0
      %p50 = por %p48, %p49
      %p51 = scmp.ne.s32.totalorder %s40, %s43
      %p52 = scmp.eq.s32.totalorder %s14, 1
      %p53 = por %p51, %p52
      %p54 = scmp.ne.s32.totalorder %s43, %s44
      %p55 = scmp.eq.s32.totalorder %s14, 0
      %p56 = por %p54, %p55
      %p57 = scmp.ne.s32.totalorder %s43, %s44
      %p58 = scmp.eq.s32.totalorder %s15, 1
      %p59 = por %p57, %p58
      %p61 = scmp.ne.s32.totalorder %s44, %s60
      %p62 = scmp.eq.s32.totalorder %s15, 0
      %p63 = por %p61, %p62
      %s64 = ssub.s32 %s9, %s16
      %p65 = scmp.eq.s32.totalorder %s64, 0
      %s67 = sadd.s32 %s66, 1
      %s68 = scalar_select %p65, %s66, %s67
      %p71 = pneg %p65
      %p72 = scmp.eq.s32.totalorder %s9, 1
      %p73 = por %p71, %p72
      %p74 = scmp.ne.s32.totalorder %s66, %s69
      %p75 = scmp.eq.s32.totalorder %s9, 0
      %p76 = por %p74, %p75
      %p77 = scmp.ne.s32.totalorder %s66, %s69
      %p78 = scmp.eq.s32.totalorder %s14, 1
      %p79 = por %p77, %p78
      %p80 = scmp.ne.s32.totalorder %s69, %s70
      %p81 = scmp.eq.s32.totalorder %s14, 0
      %p82 = por %p80, %p81
      %p83 = scmp.ne.s32.totalorder %s69, %s70
      %p84 = scmp.eq.s32.totalorder %s15, 1
      %p85 = por %p83, %p84
      %p87 = scmp.ne.s32.totalorder %s70, %s86
      %p88 = scmp.eq.s32.totalorder %s15, 0
      %p89 = por %p87, %p88
      %p90 = scmp.le.s32.totalorder 1, %s9
      %p91 = scmp.lt.s32.totalorder %s9, 3
      %p92 = pnand %p90, %p91
      %p93 = pneg %p92
      // Predicated region
      $region9: #{cam2_forward.1} parent=5 // pred_check
        _
      $region10: #{cam2_forward.1} parent=5 // pred_check_branch
        %95 = sbr.rel (%p92) target = $region12
      $region11: #{cam2_forward.1} parent=5 // pred_region
        %s96 = ssub.s32 %s9, 1
        // Predicated region
        $region13: #{cam2_forward.1} parent=11 // pred_check
          %p97 = pneg %p30
        $region14: #{cam2_forward.1} parent=11 // pred_check_branch
          %99 = sbr.rel (%p97) target = $region16
        $region15: #{cam2_forward.1} parent=11 // pred_region
          %101 = vsyncadd [#allocation4], 0
          %s103 = sshll.u32 %s0, 4
          %s104 = int_to_ptr.vmem [resolvable:$true] %s103
          %106 = dma.vmem_to_smem %s104, 16, [#allocation3], [#allocation4]
        $region16: #{cam2_forward.1} parent=11 // pred_fallthru
          _
      $region12: #{cam2_forward.1} parent=5 // pred_fallthru
        _
      %p107 = scmp.lt.s32.totalorder %s9, 2
      // Predicated region
      $region17: #{cam2_forward.1} parent=5 // pred_check
        %p108 = pneg %p107
      $region18: #{cam2_forward.1} parent=5 // pred_check_branch
        %110 = sbr.rel (%p108) target = $region20
      $region19: #{cam2_forward.1} parent=5 // pred_region
        // Predicated region
        $region21: #{cam2_forward.1} parent=19 // pred_check
          %p111 = pneg %p50
        $region22: #{cam2_forward.1} parent=19 // pred_check_branch
          %113 = sbr.rel (%p111) target = $region24
        $region23: #{cam2_forward.1} parent=19 // pred_region
          %p114 = scmp.lt.s32.totalorder %s9, 1
          %s115 = scalar_select %p114, %s9, 1
          %s116 = smul.addr %s115, 2
          %s117 = smul.addr %s116, 4
          %s118 = scalar_lea.vmem %s1, %s117
        $region24: #{cam2_forward.1} parent=19 // pred_fallthru
          _
      $region20: #{cam2_forward.1} parent=5 // pred_fallthru
        _
      %p119 = scmp.le.s32.totalorder 1, %s9
      %p120 = scmp.lt.s32.totalorder %s9, 3
      %p121 = pnand %p119, %p120
      %p122 = pneg %p121
      // Predicated region
      $region25: #{cam2_forward.1} parent=5 // pred_check
        _
      $region26: #{cam2_forward.1} parent=5 // pred_check_branch
        %124 = sbr.rel (%p121) target = $region28
      $region27: #{cam2_forward.1} parent=5 // pred_region
        %s125 = ssub.s32 %s9, 1
        // Predicated region
        $region29: #{cam2_forward.1} parent=27 // pred_check
          %p126 = pneg %p30
        $region30: #{cam2_forward.1} parent=27 // pred_check_branch
          %128 = sbr.rel (%p126) target = $region32
        $region31: #{cam2_forward.1} parent=27 // pred_region
          %130 = dma.done [#allocation4], 16
        $region32: #{cam2_forward.1} parent=27 // pred_fallthru
          _
        %131 = sfence
        %p132 = pneg %p30
        %p133 = pneg %p27
        %p134 = scmp.lt.s32.totalorder %s14, 1
        %s135 = scalar_select %p134, %s14, 1
        %s136 = smul.addr %s135, 2
        %s137 = smul.addr %s136, 4
        %s138 = scalar_lea.vmem %s1, %s137
        %p139 = pneg %p56
        %p140 = pneg %p53
        %p141 = pneg %p82
        %p142 = pneg %p79
        %p143 = scmp.lt.s32.totalorder %s14, 1
        %s144 = scalar_select %p143, %s14, 1
        %s145 = smul.addr %s144, 2
        %s146 = smul.addr %s145, 4
        %s147 = scalar_lea.vmem %s2, %s146
        %p148 = scmp.lt.s32.totalorder %s14, 1
        %s149 = scalar_select %p148, %s14, 1
        %s150 = smul.addr %s149, 2
        %s151 = smul.addr %s150, 4
        %s152 = scalar_lea.vmem %s1, %s151
        %p153 = scmp.lt.s32.totalorder %s14, 1
        %s154 = scalar_select %p153, %s14, 1
        %s155 = smul.addr %s154, 2
        %s156 = smul.addr %s155, 4
        %s157 = scalar_lea.vmem %s2, %s156
        %v158 = vld [vmem:[%s152] sm:$0xff]
        %160 = vst [vmem:[#allocation1] ss:$2 sm:$0xff] %v158
        %v161 = vld.sshfl [vmem:[#allocation1] sm:$0xff pattern:$0x75316420]
        %v162 = vld.sshfl [vmem:[#allocation1 + $0x8] sm:$0xff pattern:$0x75316420]
        %vm165 = vcmask 1043456
        %v166 = vsel %vm165, %v161, 0.0
        %v167 = vsel %vm165, %v162, 0.0
        %v168 = vadd.f32 %v166, %v167
        %169 = vadd.xlane.f32.xlu0 %v168
        %v170 = vpop.xlane.xlu0 %169
        %v171 = vmul.f32 %v170, 0.00390625
        %vm172 = vcmask 7168
        %173 = vst.msk [vmem:[#allocation2] sm:$0xff] %vm172, 0.0
        %174 = vst.msk [vmem:[#allocation2 + $0x8] sm:$0xff] %vm172, 0.0
        %vm175 = vcmask 3072
        %176 = vst.msk [vmem:[#allocation2 + $0x10] sm:$0xf] %vm175, 0.0
        %177 = vst.msk [vmem:[#allocation2 + $0x8] sm:$0xf] %vm175, %v171
        %s178 = sld [smem:[#allocation3]]
        %v179 = vld [vmem:[#allocation2 + $0x7] sm:$0xf]
        %v180 = vstv %s178
        %v181 = vmul.f32 %v180, %v179
        %s182 = sld [smem:[#allocation3 + $0x1]]
        %v183 = vld [vmem:[#allocation2 + $0x8] sm:$0xf]
        %v184 = vstv %s182
        %v185 = vmul.f32 %v184, %v183
        %v186 = vadd.f32 %v181, %v185
        %s187 = sld [smem:[#allocation3 + $0x2]]
        %v188 = vld [vmem:[#allocation2 + $0x9] sm:$0xf]
        %v189 = vstv %s187
        %v190 = vmul.f32 %v189, %v188
        %v191 = vadd.f32 %v186, %v190
        %v192 = vsub.f32 0.0, %v191
        %v193 = vmul.f32 %v192, 1.442695
        %v194 = vpow.pop %v193
        %v195 = vadd.f32 %v194, 1.0
        %v196 = vrcp.pop %v195
        %v197 = vmul.f32 %v195, %v196
        %v198 = vsub.f32 1.0, %v197
        %v199 = vmul.f32 %v196, %v198
        %v200 = vadd.f32 %v196, %v199
        %vm201 = vweird.f32 %v195
        %vm202 = vweird.f32 %v196
        %vm203 = vmor %vm201, %vm202
        %v204 = vsel %vm203, %v196, %v200
        %v205 = vand.u32 2147483647, %v195
        %vm206 = vcmp.eq.f32.partialorder %v205, 8.507059e+37
        %v207 = vand.u32 %v195, 2147483648
        %v208 = vor.u32 1.1754944e-38, %v207
        %v209 = vsel %vm206, %v208, %v204
        %v210 = vmul.f32 1.0, %v209
        %v211 = vld [vmem:[%s152] sm:$0xff]
        %213 = vset.pattern.permute.xlu0 0
        %214 = vperm.xlu0 %213, %v210
        %v215 = vpop.permute.xlu0 %214
        %v217 = vunpack.c.l.s4 839922192
        %v218 = vunpack.c.0.s8 %v217
        %v219 = vperm.slane %v215, %v218
        %v221 = vmul.f32 %v211, %v219
        %222 = vst [vmem:[%s157] sm:$0xff] %v221
        %p223 = scmp.lt.s32.totalorder %s14, 1
        %s224 = scalar_select %p223, %s14, 1
        %s225 = smul.addr %s224, 2
        %s226 = smul.addr %s225, 4
        %s227 = scalar_lea.vmem %s2, %s226
        // Predicated region
        $region33: #{cam2_forward.1} parent=27 // pred_check
          %p228 = pneg %p79
        $region34: #{cam2_forward.1} parent=27 // pred_check_branch
          %230 = sbr.rel (%p228) target = $region36
        $region35: #{cam2_forward.1} parent=27 // pred_region
          _
        $region36: #{cam2_forward.1} parent=27 // pred_fallthru
          _
      $region28: #{cam2_forward.1} parent=5 // pred_fallthru
        _
      %p231 = scmp.le.s32.totalorder 2, %s9
      // Predicated region
      $region37: #{cam2_forward.1} parent=5 // pred_check
        %p232 = pneg %p231
      $region38: #{cam2_forward.1} parent=5 // pred_check_branch
        %234 = sbr.rel (%p232) target = $region40
      $region39: #{cam2_forward.1} parent=5 // pred_region
        %s235 = ssub.s32 %s9, 2
        // Predicated region
        $region41: #{cam2_forward.1} parent=39 // pred_check
          %p236 = pneg %p85
        $region42: #{cam2_forward.1} parent=39 // pred_check_branch
          %238 = sbr.rel (%p236) target = $region44
        $region43: #{cam2_forward.1} parent=39 // pred_region
          %p239 = scmp.lt.s32.totalorder %s15, 1
          %s240 = scalar_select %p239, %s15, 1
          %s241 = smul.addr %s240, 2
          %s242 = smul.addr %s241, 4
          %s243 = scalar_lea.vmem %s2, %s242
        $region44: #{cam2_forward.1} parent=39 // pred_fallthru
          _
      $region40: #{cam2_forward.1} parent=5 // pred_fallthru
        _
    $region6: #{cam2_forward.1} parent=1 // loop_footer
      %s13 = sadd.s32 1, %s9
    $region7: #{cam2_forward.1} parent=1 // loop_footer_branch
      %8 = sbr.rel target = $region3
    $region8: #{cam2_forward.1} parent=1 // loop_exit
      _
    %244 = vsyncpa [#allocation4], 1
    %s245 = scalar_lea.sflag [#allocation4], 1
    %246 = vsyncpa %s245, 1

</llo_original>
